<compile_context>
chip_gen: v6e
topology: v6e:2x2x1
jax: 0.10.0
libtpu: 0.0.40
codegen_flags: <defaults>
</compile_context>

<pallas_src>
import functools

import numpy as np
import jax
import jax.numpy as jnp
from jax.experimental import pallas as pl
from jax.experimental.pallas import tpu as pltpu

WIN_SIZE = 11
WIN_SIGMA = 1.5
K1, K2 = 0.01, 0.03


# ----------------------------------------------------------------------------
# Filter construction (trace-time, numpy)
# ----------------------------------------------------------------------------
def _gaussian_window_np(win_size, sigma):
    coords = np.arange(win_size, dtype=np.float64) - win_size // 2
    g = np.exp(-(coords ** 2) / (2.0 * sigma ** 2))
    return (g / g.sum()).astype(np.float32)


def _valid_filter_matrix_np(n, g):
    """M[w, j] = g[w - j]; (x @ M)[:, j] = sum_k x[:, j + k] * g[k]."""
    nout = n - WIN_SIZE + 1
    idx = np.arange(n)[:, None] - np.arange(nout)[None, :]
    m = np.where((idx >= 0) & (idx < WIN_SIZE),
                 g[np.clip(idx, 0, WIN_SIZE - 1)], 0.0)
    return m.astype(np.float32)


# ----------------------------------------------------------------------------
# Tiling heuristics
# ----------------------------------------------------------------------------
def _num_tensorcores():
    """Best-effort: 2 TensorCores per chip only on v7x."""
    try:
        kind = jax.devices()[0].device_kind.lower()
    except Exception:  # pragma: no cover
        return 1
    return 2 if ("v7" in kind or "7x" in kind) else 1


def _choose_tile_g(G, H, LPW, LPWout, min_steps):
    """Largest divisor of G (lane-packed groups per step) whose per-step
    working set fits a conservative VMEM budget; keep >= min_steps steps when
    possible (min_steps=2 on v7x so the parallel axis shards across TCs)."""
    Hout = H - WIN_SIZE + 1
    budget = 16 * 1024 * 1024
    best = 1
    for d in range(1, G + 1):
        if G % d:
            continue
        if G >= min_steps and G // d < min_steps:
            continue
        inputs = 2 * 2 * d * H * LPW * 4          # pred/targ, double-buffered
        slab = 7 * d * H * LPW * 4                # x2, y2 + 5-quantity f32 slab
        zh = 5 * d * H * LPWout * 4               # horizontal-pass output
        vert = 16 * d * Hout * LPWout * 4         # vertical pass + SSIM temps
        if inputs + slab + zh + vert > budget:
            continue
        best = max(best, d)
    return best


# ----------------------------------------------------------------------------
# Kernel
# ----------------------------------------------------------------------------
def _hybrid_loss_kernel(pred_ref, targ_ref, gw_ref, out_ref, *,
                        data_range, tile_g, h, lpw, lp_wout, g_taps):
    hout = h - WIN_SIZE + 1

    x = pred_ref[...].astype(jnp.float32)        # (tile_g, H, LP*W)
    y = targ_ref[...].astype(jnp.float32)

    # ---- L1 partial sum --------------------------------------------------
    l1_part = jnp.sum(jnp.abs(x - y))

    # ---- SSIM: separable Gaussian filter ----------------------------------
    # Stack the five filtered quantities along the sublane axis (all f32 --
    # second moments must NOT be rounded before filtering).
    x2 = x.reshape(tile_g * h, lpw)
    y2 = y.reshape(tile_g * h, lpw)
    slab = jnp.concatenate([x2, y2, x2 * x2, y2 * y2, x2 * y2], axis=0)

    # Horizontal (lane) pass: ONE MXU matmul, K = LP*W lanes fully dense.
    # gw_ref = kron(eye(LP), gw) so lane-packed images never mix.
    zh = jnp.dot(slab, gw_ref[...],
                 preferred_element_type=jnp.float32)     # (5*T*H, LP*Wout)

    # Vertical (sublane) pass: 11 shifted slice-FMAs on the VPU (exact f32).
    zh3 = zh.reshape(5 * tile_g, h, lp_wout)
    zv = g_taps[0] * zh3[:, 0:hout, :]
    for k in range(1, WIN_SIZE):
        zv = zv + g_taps[k] * zh3[:, k:k + hout, :]      # (5*T, Hout, LP*Wout)

    t = tile_g
    mu1 = zv[0 * t:1 * t]
    mu2 = zv[1 * t:2 * t]
    fxx = zv[2 * t:3 * t]
    fyy = zv[3 * t:4 * t]
    fxy = zv[4 * t:5 * t]

    sigma1_sq = fxx - mu1 * mu1
    sigma2_sq = fyy - mu2 * mu2
    sigma12 = fxy - mu1 * mu2

    c1 = (K1 * data_range) ** 2
    c2 = (K2 * data_range) ** 2
    lum_num = 2.0 * mu1 * mu2 + c1
    lum_den = mu1 * mu1 + mu2 * mu2 + c1
    cs_num = 2.0 * sigma12 + c2
    cs_den = sigma1_sq + sigma2_sq + c2
    # Divisions go to the EUP slot (otherwise idle) via approximate reciprocal.
    ssim_map = (lum_num * pl.reciprocal(lum_den, approx=True)
                * cs_num * pl.reciprocal(cs_den, approx=True))
    ssim_part = jnp.sum(ssim_map)

    # ---- merged, lane-dense writeback: one full (8,128) f32 tile ----------
    rows = jax.lax.broadcasted_iota(jnp.int32, (1, 8, 128), 1)
    out_ref[...] = jnp.where(rows == 0, l1_part,
                             jnp.where(rows == 1, ssim_part, 0.0))


# ----------------------------------------------------------------------------
# Wrapper
# ----------------------------------------------------------------------------
def hybrid_loss(pred, target, alpha=0.8, data_range=1.0):
    # TODO(synk): F.interpolate(bilinear) resize branch of the PyTorch module
    # is not implemented; shapes must match.
    assert pred.shape == target.shape, "shape-mismatch resize branch not implemented"
    N, C, H, W = pred.shape
    assert H >= WIN_SIZE and W >= WIN_SIZE, "SSIM needs H, W >= 11"
    Hout, Wout = H - WIN_SIZE + 1, W - WIN_SIZE + 1
    B = N * C

    # Lane packing: put LP images side by side along the lane axis (W < 128).
    lp_cap = max(1, 128 // W)
    LP = 1
    for d in range(1, min(B, lp_cap) + 1):
        if B % d == 0:
            LP = d
    G = B // LP
    LPW = LP * W
    LPWout = LP * Wout

    num_tc = _num_tensorcores()
    tile_g = _choose_tile_g(G, H, LPW, LPWout, min_steps=num_tc)
    num_blocks = G // tile_g

    g_np = _gaussian_window_np(WIN_SIZE, WIN_SIGMA)
    gw = _valid_filter_matrix_np(W, g_np)                     # (W, Wout)
    gw_packed = jnp.asarray(np.kron(np.eye(LP, dtype=np.float32), gw))

    def pack(z):                                              # (B,H,W)->(G,H,LP*W)
        return z.reshape(G, LP, H, W).transpose(0, 2, 1, 3).reshape(G, H, LPW)

    predp = pack(pred.reshape(B, H, W).astype(jnp.float32))
    targp = pack(target.reshape(B, H, W).astype(jnp.float32))

    kernel = functools.partial(
        _hybrid_loss_kernel, data_range=float(data_range), tile_g=tile_g,
        h=H, lpw=LPW, lp_wout=LPWout,
        g_taps=tuple(float(v) for v in g_np))

    parts = pl.pallas_call(
        kernel,
        out_shape=jax.ShapeDtypeStruct((num_blocks, 8, 128), jnp.float32),
        grid_spec=pltpu.PrefetchScalarGridSpec(
            num_scalar_prefetch=0,
            grid=(num_blocks,),
            in_specs=[
                pl.BlockSpec((tile_g, H, LPW), lambda b: (b, 0, 0)),
                pl.BlockSpec((tile_g, H, LPW), lambda b: (b, 0, 0)),
                # Constant filter block: constant index_map -> fetched once.
                pl.BlockSpec((LPW, LPWout), lambda b: (0, 0)),
            ],
            out_specs=pl.BlockSpec((1, 8, 128), lambda b: (b, 0, 0)),
        ),
        compiler_params=pltpu.CompilerParams(
            dimension_semantics=("parallel",),
            vmem_limit_bytes=32 * 1024 * 1024),
    )(predp, targp, gw_packed)

    l1 = jnp.sum(parts[:, 0, 0]) / (N * C * H * W)
    ssim_val = jnp.sum(parts[:, 1, 0]) / (N * C * Hout * Wout)
    return alpha * l1 + (1.0 - alpha) * (1.0 - ssim_val)


# ----------------------------------------------------------------------------
# Pure-JAX reference (same math, no Pallas) for a sanity check
# ----------------------------------------------------------------------------
def _reference_loss(pred, target, alpha=0.8, data_range=1.0):
    N, C, H, W = pred.shape
    g = _gaussian_window_np(WIN_SIZE, WIN_SIGMA)
    gw = jnp.asarray(_valid_filter_matrix_np(W, g))           # (W, Wout)
    gh = jnp.asarray(_valid_filter_matrix_np(H, g).T)         # (Hout, H)

    def gfilt(z):  # z: (N, C, H, W)
        zh = jnp.einsum('nchw,wv->nchv', z, gw)
        return jnp.einsum('ih,nchv->nciv', gh, zh)

    x = pred.astype(jnp.float32)
    y = target.astype(jnp.float32)
    mu1, mu2 = gfilt(x), gfilt(y)
    s11 = gfilt(x * x) - mu1 * mu1
    s22 = gfilt(y * y) - mu2 * mu2
    s12 = gfilt(x * y) - mu1 * mu2
    c1, c2 = (K1 * data_range) ** 2, (K2 * data_range) ** 2
    cs = (2 * s12 + c2) / (s11 + s22 + c2)
    ssim_map = ((2 * mu1 * mu2 + c1) / (mu1 * mu1 + mu2 * mu2 + c1)) * cs
    l1 = jnp.mean(jnp.abs(x - y))
    ssim_val = jnp.mean(ssim_map)
    return alpha * l1 + (1 - alpha) * (1 - ssim_val)


if __name__ == "__main__":
    key = jax.random.PRNGKey(0)
    k1, k2 = jax.random.split(key)
    # batch=2, channels=4 (len(config.bands) ~ 4 bands), spatial 16x16, in [0, 1]
    pred = jax.random.uniform(k1, (2, 4, 16, 16), dtype=jnp.float32)
    target = jax.random.uniform(k2, (2, 4, 16, 16), dtype=jnp.float32)

    loss = jax.block_until_ready(hybrid_loss(pred, target, alpha=0.8))
    ref = jax.block_until_ready(_reference_loss(pred, target, alpha=0.8))

    assert jnp.isfinite(loss), "loss is not finite"
    assert abs(float(loss) - float(ref)) < 1e-2, (float(loss), float(ref))
    print("KERNEL_OK")
</pallas_src>

<mosaic_0001>
module attributes {stable_mosaic.version = 11 : i64} {
  func.func @_hybrid_loss_kernel(%arg0: i32, %arg1: memref<1x16x128xf32, #tpu.memory_space<vmem>>, %arg2: memref<1x16x128xf32, #tpu.memory_space<vmem>>, %arg3: memref<128x48xf32, #tpu.memory_space<vmem>>, %arg4: memref<1x8x128xf32, #tpu.memory_space<vmem>>) attributes {dimension_semantics = [#tpu.dimension_semantics<parallel>], iteration_bounds = array<i64: 1>, scalar_prefetch = 0 : i64, scratch_operands = 0 : i64, tpu.core_type = #tpu.core_type<tc>, window_params = [{transform_indices = @transform_0, window_bounds = array<i64: 1, 16, 128>}, {transform_indices = @transform_1, window_bounds = array<i64: 1, 16, 128>}, {pipeline_mode = #tpu.pipeline_mode<synchronous>, transform_indices = @transform_2, window_bounds = array<i64: 128, 48>}, {transform_indices = @transform_3, window_bounds = array<i64: 1, 8, 128>}]} {
    %c0 = arith.constant 0 : index
    %c0_0 = arith.constant 0 : index
    %c0_1 = arith.constant 0 : index
    %0 = vector.load %arg1[%c0, %c0_0, %c0_1] : memref<1x16x128xf32, #tpu.memory_space<vmem>>, vector<1x16x128xf32>
    %c0_2 = arith.constant 0 : index
    %c0_3 = arith.constant 0 : index
    %c0_4 = arith.constant 0 : index
    %1 = vector.load %arg2[%c0_2, %c0_3, %c0_4] : memref<1x16x128xf32, #tpu.memory_space<vmem>>, vector<1x16x128xf32>
    %2 = arith.subf %0, %1 : vector<1x16x128xf32>
    %3 = math.absf %2 : vector<1x16x128xf32>
    %4 = vector.shape_cast %3 : vector<1x16x128xf32> to vector<1x1x16x128xf32>
    %cst = arith.constant dense<0.000000e+00> : vector<1xf32>
    %5 = vector.multi_reduction <add>, %4, %cst [1, 2, 3] : vector<1x1x16x128xf32> to vector<1xf32>
    %6 = vector.shape_cast %5 : vector<1xf32> to vector<1x1x1x1xf32>
    %7 = vector.extract %6[0, 0, 0, 0] : f32 from vector<1x1x1x1xf32>
    %8 = vector.shape_cast %0 : vector<1x16x128xf32> to vector<16x128xf32>
    %9 = vector.shape_cast %1 : vector<1x16x128xf32> to vector<16x128xf32>
    %10 = arith.mulf %8, %8 : vector<16x128xf32>
    %11 = arith.mulf %9, %9 : vector<16x128xf32>
    %12 = arith.mulf %8, %9 : vector<16x128xf32>
    %13 = tpu.concatenate %8, %9, %10, %11, %12 in 0 : vector<16x128xf32>, vector<16x128xf32>, vector<16x128xf32>, vector<16x128xf32>, vector<16x128xf32> -> vector<80x128xf32>
    %c0_5 = arith.constant 0 : index
    %c0_6 = arith.constant 0 : index
    %14 = vector.load %arg3[%c0_5, %c0_6] : memref<128x48xf32, #tpu.memory_space<vmem>>, vector<128x48xf32>
    %cst_7 = arith.constant dense<0.000000e+00> : vector<80x48xf32>
    %15 = tpu.matmul %13, %14, %cst_7 {dimension_numbers = #tpu.dot_dimension_numbers<[1], [0], [0], [1], [0, 0, 1, 1], [], []>} : vector<80x128xf32>, vector<128x48xf32>, vector<80x48xf32> -> vector<80x48xf32>
    %16 = vector.shape_cast %15 : vector<80x48xf32> to vector<5x16x48xf32>
    %17 = vector.extract_strided_slice %16 {offsets = [0, 0, 0], sizes = [5, 6, 48], strides = [1, 1, 1]} : vector<5x16x48xf32> to vector<5x6x48xf32>
    %cst_8 = arith.constant 0.00102838012 : f32
    %18 = vector.broadcast %cst_8 : f32 to vector<5x6x48xf32>
    %19 = arith.mulf %18, %17 : vector<5x6x48xf32>
    %20 = vector.extract_strided_slice %16 {offsets = [0, 1, 0], sizes = [5, 6, 48], strides = [1, 1, 1]} : vector<5x16x48xf32> to vector<5x6x48xf32>
    %cst_9 = arith.constant 0.00759875821 : f32
    %21 = vector.broadcast %cst_9 : f32 to vector<5x6x48xf32>
    %22 = arith.mulf %21, %20 : vector<5x6x48xf32>
    %23 = arith.addf %19, %22 : vector<5x6x48xf32>
    %24 = vector.extract_strided_slice %16 {offsets = [0, 2, 0], sizes = [5, 6, 48], strides = [1, 1, 1]} : vector<5x16x48xf32> to vector<5x6x48xf32>
    %cst_10 = arith.constant 0.0360007733 : f32
    %25 = vector.broadcast %cst_10 : f32 to vector<5x6x48xf32>
    %26 = arith.mulf %25, %24 : vector<5x6x48xf32>
    %27 = arith.addf %23, %26 : vector<5x6x48xf32>
    %28 = vector.extract_strided_slice %16 {offsets = [0, 3, 0], sizes = [5, 6, 48], strides = [1, 1, 1]} : vector<5x16x48xf32> to vector<5x6x48xf32>
    %cst_11 = arith.constant 0.109360687 : f32
    %29 = vector.broadcast %cst_11 : f32 to vector<5x6x48xf32>
    %30 = arith.mulf %29, %28 : vector<5x6x48xf32>
    %31 = arith.addf %27, %30 : vector<5x6x48xf32>
    %32 = vector.extract_strided_slice %16 {offsets = [0, 4, 0], sizes = [5, 6, 48], strides = [1, 1, 1]} : vector<5x16x48xf32> to vector<5x6x48xf32>
    %cst_12 = arith.constant 0.213005543 : f32
    %33 = vector.broadcast %cst_12 : f32 to vector<5x6x48xf32>
    %34 = arith.mulf %33, %32 : vector<5x6x48xf32>
    %35 = arith.addf %31, %34 : vector<5x6x48xf32>
    %36 = vector.extract_strided_slice %16 {offsets = [0, 5, 0], sizes = [5, 6, 48], strides = [1, 1, 1]} : vector<5x16x48xf32> to vector<5x6x48xf32>
    %cst_13 = arith.constant 0.266011715 : f32
    %37 = vector.broadcast %cst_13 : f32 to vector<5x6x48xf32>
    %38 = arith.mulf %37, %36 : vector<5x6x48xf32>
    %39 = arith.addf %35, %38 : vector<5x6x48xf32>
    %40 = vector.extract_strided_slice %16 {offsets = [0, 6, 0], sizes = [5, 6, 48], strides = [1, 1, 1]} : vector<5x16x48xf32> to vector<5x6x48xf32>
    %cst_14 = arith.constant 0.213005543 : f32
    %41 = vector.broadcast %cst_14 : f32 to vector<5x6x48xf32>
    %42 = arith.mulf %41, %40 : vector<5x6x48xf32>
    %43 = arith.addf %39, %42 : vector<5x6x48xf32>
    %44 = vector.extract_strided_slice %16 {offsets = [0, 7, 0], sizes = [5, 6, 48], strides = [1, 1, 1]} : vector<5x16x48xf32> to vector<5x6x48xf32>
    %cst_15 = arith.constant 0.109360687 : f32
    %45 = vector.broadcast %cst_15 : f32 to vector<5x6x48xf32>
    %46 = arith.mulf %45, %44 : vector<5x6x48xf32>
    %47 = arith.addf %43, %46 : vector<5x6x48xf32>
    %48 = vector.extract_strided_slice %16 {offsets = [0, 8, 0], sizes = [5, 6, 48], strides = [1, 1, 1]} : vector<5x16x48xf32> to vector<5x6x48xf32>
    %cst_16 = arith.constant 0.0360007733 : f32
    %49 = vector.broadcast %cst_16 : f32 to vector<5x6x48xf32>
    %50 = arith.mulf %49, %48 : vector<5x6x48xf32>
    %51 = arith.addf %47, %50 : vector<5x6x48xf32>
    %52 = vector.extract_strided_slice %16 {offsets = [0, 9, 0], sizes = [5, 6, 48], strides = [1, 1, 1]} : vector<5x16x48xf32> to vector<5x6x48xf32>
    %cst_17 = arith.constant 0.00759875821 : f32
    %53 = vector.broadcast %cst_17 : f32 to vector<5x6x48xf32>
    %54 = arith.mulf %53, %52 : vector<5x6x48xf32>
    %55 = arith.addf %51, %54 : vector<5x6x48xf32>
    %56 = vector.extract_strided_slice %16 {offsets = [0, 10, 0], sizes = [5, 6, 48], strides = [1, 1, 1]} : vector<5x16x48xf32> to vector<5x6x48xf32>
    %cst_18 = arith.constant 0.00102838012 : f32
    %57 = vector.broadcast %cst_18 : f32 to vector<5x6x48xf32>
    %58 = arith.mulf %57, %56 : vector<5x6x48xf32>
    %59 = arith.addf %55, %58 : vector<5x6x48xf32>
    %60 = vector.extract_strided_slice %59 {offsets = [0, 0, 0], sizes = [1, 6, 48], strides = [1, 1, 1]} : vector<5x6x48xf32> to vector<1x6x48xf32>
    %61 = vector.extract_strided_slice %59 {offsets = [1, 0, 0], sizes = [1, 6, 48], strides = [1, 1, 1]} : vector<5x6x48xf32> to vector<1x6x48xf32>
    %62 = vector.extract_strided_slice %59 {offsets = [2, 0, 0], sizes = [1, 6, 48], strides = [1, 1, 1]} : vector<5x6x48xf32> to vector<1x6x48xf32>
    %63 = vector.extract_strided_slice %59 {offsets = [3, 0, 0], sizes = [1, 6, 48], strides = [1, 1, 1]} : vector<5x6x48xf32> to vector<1x6x48xf32>
    %64 = vector.extract_strided_slice %59 {offsets = [4, 0, 0], sizes = [1, 6, 48], strides = [1, 1, 1]} : vector<5x6x48xf32> to vector<1x6x48xf32>
    %65 = arith.mulf %60, %60 : vector<1x6x48xf32>
    %66 = arith.subf %62, %65 : vector<1x6x48xf32>
    %67 = arith.mulf %61, %61 : vector<1x6x48xf32>
    %68 = arith.subf %63, %67 : vector<1x6x48xf32>
    %69 = arith.mulf %60, %61 : vector<1x6x48xf32>
    %70 = arith.subf %64, %69 : vector<1x6x48xf32>
    %cst_19 = arith.constant 2.000000e+00 : f32
    %71 = vector.broadcast %cst_19 : f32 to vector<1x6x48xf32>
    %72 = arith.mulf %71, %60 : vector<1x6x48xf32>
    %73 = arith.mulf %72, %61 : vector<1x6x48xf32>
    %cst_20 = arith.constant 9.99999974E-5 : f32
    %74 = vector.broadcast %cst_20 : f32 to vector<1x6x48xf32>
    %75 = arith.addf %73, %74 : vector<1x6x48xf32>
    %76 = arith.mulf %60, %60 : vector<1x6x48xf32>
    %77 = arith.mulf %61, %61 : vector<1x6x48xf32>
    %78 = arith.addf %76, %77 : vector<1x6x48xf32>
    %cst_21 = arith.constant 9.99999974E-5 : f32
    %79 = vector.broadcast %cst_21 : f32 to vector<1x6x48xf32>
    %80 = arith.addf %78, %79 : vector<1x6x48xf32>
    %cst_22 = arith.constant 2.000000e+00 : f32
    %81 = vector.broadcast %cst_22 : f32 to vector<1x6x48xf32>
    %82 = arith.mulf %81, %70 : vector<1x6x48xf32>
    %cst_23 = arith.constant 8.99999984E-4 : f32
    %83 = vector.broadcast %cst_23 : f32 to vector<1x6x48xf32>
    %84 = arith.addf %82, %83 : vector<1x6x48xf32>
    %85 = arith.addf %66, %68 : vector<1x6x48xf32>
    %cst_24 = arith.constant 8.99999984E-4 : f32
    %86 = vector.broadcast %cst_24 : f32 to vector<1x6x48xf32>
    %87 = arith.addf %85, %86 : vector<1x6x48xf32>
    %88 = tpu.reciprocal %80 {approx = true} : vector<1x6x48xf32> -> vector<1x6x48xf32>
    %89 = arith.mulf %75, %88 : vector<1x6x48xf32>
    %90 = arith.mulf %89, %84 : vector<1x6x48xf32>
    %91 = tpu.reciprocal %87 {approx = true} : vector<1x6x48xf32> -> vector<1x6x48xf32>
    %92 = arith.mulf %90, %91 : vector<1x6x48xf32>
    %93 = vector.shape_cast %92 : vector<1x6x48xf32> to vector<1x1x6x48xf32>
    %cst_25 = arith.constant dense<0.000000e+00> : vector<1xf32>
    %94 = vector.multi_reduction <add>, %93, %cst_25 [1, 2, 3] : vector<1x1x6x48xf32> to vector<1xf32>
    %95 = vector.shape_cast %94 : vector<1xf32> to vector<1x1x1x1xf32>
    %96 = vector.extract %95[0, 0, 0, 0] : f32 from vector<1x1x1x1xf32>
    %97 = tpu.iota {dimensions = array<i32: 1>} : vector<1x8x128xi32>
    %c0_i32 = arith.constant 0 : i32
    %98 = vector.broadcast %c0_i32 : i32 to vector<1x8x128xi32>
    %99 = arith.cmpi eq, %97, %98 : vector<1x8x128xi32>
    %c1_i32 = arith.constant 1 : i32
    %100 = vector.broadcast %c1_i32 : i32 to vector<1x8x128xi32>
    %101 = arith.cmpi eq, %97, %100 : vector<1x8x128xi32>
    %cst_26 = arith.constant 0.000000e+00 : f32
    %102 = vector.broadcast %96 : f32 to vector<1x8x128xf32>
    %103 = vector.broadcast %cst_26 : f32 to vector<1x8x128xf32>
    %104 = arith.select %101, %102, %103 : vector<1x8x128xi1>, vector<1x8x128xf32>
    %105 = vector.broadcast %7 : f32 to vector<1x8x128xf32>
    %106 = arith.select %99, %105, %104 : vector<1x8x128xi1>, vector<1x8x128xf32>
    %c0_27 = arith.constant 0 : index
    %c0_28 = arith.constant 0 : index
    %c0_29 = arith.constant 0 : index
    %107 = vector.load %arg4[%c0_27, %c0_28, %c0_29] : memref<1x8x128xf32, #tpu.memory_space<vmem>>, vector<1x8x128xf32>
    tpu.vector_store %arg4[%c0_27, %c0_28, %c0_29], %106 {strides = array<i32>} : memref<1x8x128xf32, #tpu.memory_space<vmem>>, vector<1x8x128xf32>,
    return
  }
  func.func @transform_0(%arg0: i32) -> (i32, i32, i32) {
    %c0_i32 = arith.constant 0 : i32
    %c0_i32_0 = arith.constant 0 : i32
    %c0_i32_1 = arith.constant 0 : i32
    return %arg0, %c0_i32, %c0_i32_0 : i32, i32, i32
  }
  func.func @transform_1(%arg0: i32) -> (i32, i32, i32) {
    %c0_i32 = arith.constant 0 : i32
    %c0_i32_0 = arith.constant 0 : i32
    %c0_i32_1 = arith.constant 0 : i32
    return %arg0, %c0_i32, %c0_i32_0 : i32, i32, i32
  }
  func.func @transform_2(%arg0: i32) -> (i32, i32) {
    %c0_i32 = arith.constant 0 : i32
    %c0_i32_0 = arith.constant 0 : i32
    %c0_i32_1 = arith.constant 0 : i32
    return %c0_i32, %c0_i32_0 : i32, i32
  }
  func.func @transform_3(%arg0: i32) -> (i32, i32, i32) {
    %c0_i32 = arith.constant 0 : i32
    %c0_i32_0 = arith.constant 0 : i32
    %c0_i32_1 = arith.constant 0 : i32
    return %arg0, %c0_i32, %c0_i32_0 : i32, i32, i32
  }
}

</mosaic_0001>

<llo_original>
// kernel: tpu_custom_call.1
$region0: #{tpu_custom_call.1}
  #allocation0 [shape = 'u32[]', space=smem, size = 0x4, offset = 0x4, fixed_abs, tag = 'smem constant byte address 0x4 - core index']
  #allocation1 [shape = 'u32[144,128]{1,0:T(1,128)}', space=vmem, size = 0x12000, scoped, tag = 'internal scratch']
  %s0 = inlined_call_operand.vmem [shape: f32[1,16,128], index: 0, kind: input, shape index: {}]
  %s1 = inlined_call_operand.vmem [shape: f32[1,16,128], index: 1, kind: input, shape index: {}]
  %s2 = inlined_call_operand.vmem [shape: f32[128,48], index: 2, kind: input, shape index: {}]
  %s3 = inlined_call_operand.hbm [shape: f32[1,8,128], index: 3, kind: output, shape index: {}]
  %s4 = sld [smem:[#allocation0]]
  $region22: #{tpu_custom_call.1} parent=0
    _
  %s6 = ssub.s32 1, %s4
  %s7 = scalar_select 0, %s6, %s4
  $region1: #{tpu_custom_call.1} parent=0
    #allocation2 [shape = 'u8[4096]{0}', space=vmem, size = 0x1000, scoped, tag = 'output window, operand 0, single buffered']
    #allocation3 [shape = 's32[1]{0}', space=sflag, size = 0x4, scoped, tag = 'scoped memory for tpu_custom_call.1']
    %8 = vsyncpa [#allocation3], 0
    // Predicated region
    $region2: #{tpu_custom_call.1} parent=1 // pred_check
      _
    $region3: #{tpu_custom_call.1} parent=1 // pred_check_branch
      %10 = sbr.rel (0) target = $region5
    $region4: #{tpu_custom_call.1} parent=1 // pred_region
      _
    $region5: #{tpu_custom_call.1} parent=1 // pred_fallthru
      _
    // Predicated region
    $region6: #{tpu_custom_call.1} parent=1 // pred_check
      _
    $region7: #{tpu_custom_call.1} parent=1 // pred_check_branch
      %12 = sbr.rel (0) target = $region9
    $region8: #{tpu_custom_call.1} parent=1 // pred_region
      _
    $region9: #{tpu_custom_call.1} parent=1 // pred_fallthru
      _
    // Predicated region
    $region10: #{tpu_custom_call.1} parent=1 // pred_check
      _
    $region11: #{tpu_custom_call.1} parent=1 // pred_check_branch
      %14 = sbr.rel (0) target = $region13
    $region12: #{tpu_custom_call.1} parent=1 // pred_region
      _
    $region13: #{tpu_custom_call.1} parent=1 // pred_fallthru
      _
    %v15 = vld [vmem:[%s0] sm:$0xff]
    %v16 = vld [vmem:[%s0 + $0x8] sm:$0xff]
    %v17 = vld [vmem:[%s1] sm:$0xff]
    %v18 = vld [vmem:[%s1 + $0x8] sm:$0xff]
    %v19 = vsub.f32 %v15, %v17
    %v20 = vsub.f32 %v16, %v18
    %v21 = vand.u32 2147483647, %v19
    %v22 = vand.u32 2147483647, %v20
    %v23 = vadd.f32 %v21, %v22
    %24 = vadd.xlane.f32.xlu0 %v23
    %v25 = vpop.xlane.xlu0 %24
    %v26 = vrot.slane %v25, 4
    %v27 = vadd.f32 %v25, %v26
    %v28 = vrot.slane %v27, 2
    %v29 = vadd.f32 %v27, %v28
    %v30 = vrot.slane %v29, 1
    %v31 = vadd.f32 %v29, %v30
    %s32 = vtos %v31
    %v33 = vmul.f32 %v15, %v15
    %v34 = vmul.f32 %v16, %v16
    %v35 = vmul.f32 %v17, %v17
    %v36 = vmul.f32 %v18, %v18
    %v37 = vmul.f32 %v15, %v17
    %v38 = vmul.f32 %v16, %v18
    %v39 = vld [vmem:[%s2] sm:$0xff]
    %v40 = vld [vmem:[%s2 + $0x8] sm:$0xff]
    %v41 = vld [vmem:[%s2 + $0x10] sm:$0xff]
    %v42 = vld [vmem:[%s2 + $0x18] sm:$0xff]
    %v43 = vld [vmem:[%s2 + $0x20] sm:$0xff]
    %v44 = vld [vmem:[%s2 + $0x28] sm:$0xff]
    %v45 = vld [vmem:[%s2 + $0x30] sm:$0xff]
    %v46 = vld [vmem:[%s2 + $0x38] sm:$0xff]
    %v47 = vld [vmem:[%s2 + $0x40] sm:$0xff]
    %v48 = vld [vmem:[%s2 + $0x48] sm:$0xff]
    %v49 = vld [vmem:[%s2 + $0x50] sm:$0xff]
    %v50 = vld [vmem:[%s2 + $0x58] sm:$0xff]
    %v51 = vld [vmem:[%s2 + $0x60] sm:$0xff]
    %v52 = vld [vmem:[%s2 + $0x68] sm:$0xff]
    %v53 = vld [vmem:[%s2 + $0x70] sm:$0xff]
    %v54 = vld [vmem:[%s2 + $0x78] sm:$0xff]
    %55 = vmatprep.subr.mxu0 0.0
    %56 = vmatpush1.msra.mxu0 %v54
    %57 = vmatprep.subr.mxu0 0.0
    %58 = vmatpush1.msra.mxu0 %v53
    %59 = vmatprep.subr.mxu0 0.0
    %60 = vmatpush1.msra.mxu0 %v52
    %61 = vmatprep.subr.mxu0 0.0
    %62 = vmatpush1.msra.mxu0 %v51
    %63 = vmatprep.subr.mxu0 0.0
    %64 = vmatpush1.msra.mxu0 %v50
    %65 = vmatprep.subr.mxu0 0.0
    %66 = vmatpush1.msra.mxu0 %v49
    %67 = vmatprep.subr.mxu0 0.0
    %68 = vmatpush1.msra.mxu0 %v48
    %69 = vmatprep.subr.mxu0 0.0
    %70 = vmatpush1.msra.mxu0 %v47
    %71 = vmatprep.subr.mxu0 0.0
    %72 = vmatpush1.msra.mxu0 %v46
    %73 = vmatprep.subr.mxu0 0.0
    %74 = vmatpush1.msra.mxu0 %v45
    %75 = vmatprep.subr.mxu0 0.0
    %76 = vmatpush1.msra.mxu0 %v44
    %77 = vmatprep.subr.mxu0 0.0
    %78 = vmatpush1.msra.mxu0 %v43
    %79 = vmatprep.subr.mxu0 0.0
    %80 = vmatpush1.msra.mxu0 %v42
    %81 = vmatprep.subr.mxu0 0.0
    %82 = vmatpush1.msra.mxu0 %v41
    %83 = vmatprep.subr.mxu0 0.0
    %84 = vmatpush1.msra.mxu0 %v40
    %85 = vmatprep.subr.mxu0 0.0
    %86 = vmatpush1.msra.mxu0 %v39
    %87 = vmatprep.subr.mxu0 0.0
    %88 = vmatpush2.msra.mxu0 0.0
    %89 = vmatprep.subr.mxu0 0.0
    %90 = vmatpush2.msra.mxu0 0.0
    %91 = vmatprep.subr.mxu0 0.0
    %92 = vmatpush2.msra.mxu0 0.0
    %93 = vmatprep.subr.mxu0 0.0
    %94 = vmatpush2.msra.mxu0 0.0
    %95 = vmatprep.subr.mxu0 0.0
    %96 = vmatpush2.msra.mxu0 0.0
    %97 = vmatprep.subr.mxu0 0.0
    %98 = vmatpush2.msra.mxu0 0.0
    %99 = vmatprep.subr.mxu0 0.0
    %100 = vmatpush2.msra.mxu0 0.0
    %101 = vmatprep.subr.mxu0 0.0
    %102 = vmatpush2.msra.mxu0 0.0
    %103 = vmatprep.subr.mxu0 0.0
    %104 = vmatpush2.msra.mxu0 0.0
    %105 = vmatprep.subr.mxu0 0.0
    %106 = vmatpush2.msra.mxu0 0.0
    %107 = vmatprep.subr.mxu0 0.0
    %108 = vmatpush2.msra.mxu0 0.0
    %109 = vmatprep.subr.mxu0 0.0
    %110 = vmatpush2.msra.mxu0 0.0
    %111 = vmatprep.subr.mxu0 0.0
    %112 = vmatpush2.msra.mxu0 0.0
    %113 = vmatprep.subr.mxu0 0.0
    %114 = vmatpush2.msra.mxu0 0.0
    %115 = vmatprep.subr.mxu0 0.0
    %116 = vmatpush2.msra.mxu0 0.0
    %117 = vmatprep.subr.mxu0 0.0
    %118 = vmatpush2.msra.mxu0 0.0
    %119 = vmatprep.mubr.f32.mxu0 0.0
    %120 = vmatmul.mubr.f32.gmra.mxu0 %v15
    %v121 = vpop.f32.mrf.mxu0
    %v122 = vadd.f32 0.0, %v121
    %v123 = vpop.f32.mrf.mxu0
    %124 = vmatprep.mubr.f32.mxu0 0.0
    %125 = vmatmul.mubr.f32.gmra.mxu0 %v16
    %v126 = vpop.f32.mrf.mxu0
    %v127 = vadd.f32 0.0, %v126
    %v128 = vpop.f32.mrf.mxu0
    %129 = vmatprep.mubr.f32.mxu0 0.0
    %130 = vmatmul.mubr.f32.gmra.mxu0 %v17
    %v131 = vpop.f32.mrf.mxu0
    %v132 = vadd.f32 0.0, %v131
    %v133 = vpop.f32.mrf.mxu0
    %134 = vmatprep.mubr.f32.mxu0 0.0
    %135 = vmatmul.mubr.f32.gmra.mxu0 %v18
    %v136 = vpop.f32.mrf.mxu0
    %v137 = vadd.f32 0.0, %v136
    %v138 = vpop.f32.mrf.mxu0
    %139 = vmatprep.mubr.f32.mxu0 0.0
    %140 = vmatmul.mubr.f32.gmra.mxu0 %v33
    %v141 = vpop.f32.mrf.mxu0
    %v142 = vadd.f32 0.0, %v141
    %v143 = vpop.f32.mrf.mxu0
    %144 = vmatprep.mubr.f32.mxu0 0.0
    %145 = vmatmul.mubr.f32.gmra.mxu0 %v34
    %v146 = vpop.f32.mrf.mxu0
    %v147 = vadd.f32 0.0, %v146
    %v148 = vpop.f32.mrf.mxu0
    %149 = vmatprep.mubr.f32.mxu0 0.0
    %150 = vmatmul.mubr.f32.gmra.mxu0 %v35
    %v151 = vpop.f32.mrf.mxu0
    %v152 = vadd.f32 0.0, %v151
    %v153 = vpop.f32.mrf.mxu0
    %154 = vmatprep.mubr.f32.mxu0 0.0
    %155 = vmatmul.mubr.f32.gmra.mxu0 %v36
    %v156 = vpop.f32.mrf.mxu0
    %v157 = vadd.f32 0.0, %v156
    %v158 = vpop.f32.mrf.mxu0
    %159 = vmatprep.mubr.f32.mxu0 0.0
    %160 = vmatmul.mubr.f32.gmra.mxu0 %v37
    %v161 = vpop.f32.mrf.mxu0
    %v162 = vadd.f32 0.0, %v161
    %v163 = vpop.f32.mrf.mxu0
    %164 = vmatprep.mubr.f32.mxu0 0.0
    %165 = vmatmul.mubr.f32.gmra.mxu0 %v38
    %v166 = vpop.f32.mrf.mxu0
    %v167 = vadd.f32 0.0, %v166
    %v168 = vpop.f32.mrf.mxu0
    %169 = vdwg.mxu0
    %v170 = vmul.f32 %v122, 0.0010283801
    %v171 = vmul.f32 %v132, 0.0010283801
    %v172 = vmul.f32 %v142, 0.0010283801
    %v173 = vmul.f32 %v152, 0.0010283801
    %v174 = vmul.f32 %v162, 0.0010283801
    %v175 = vmul.f32 %v122, 0.007598758
    %v176 = vmul.f32 %v132, 0.007598758
    %v177 = vmul.f32 %v142, 0.007598758
    %v178 = vmul.f32 %v152, 0.007598758
    %v179 = vmul.f32 %v162, 0.007598758
    %v185 = vrot.slane %v175, 1
    %v186 = vrot.slane %v176, 1
    %v187 = vrot.slane %v177, 1
    %v188 = vrot.slane %v178, 1
    %v189 = vrot.slane %v179, 1
    %v195 = vadd.f32 %v170, %v185
    %v196 = vadd.f32 %v171, %v186
    %v197 = vadd.f32 %v172, %v187
    %v198 = vadd.f32 %v173, %v188
    %v199 = vadd.f32 %v174, %v189
    %v200 = vmul.f32 %v122, 0.036000773
    %v201 = vmul.f32 %v132, 0.036000773
    %v202 = vmul.f32 %v142, 0.036000773
    %v203 = vmul.f32 %v152, 0.036000773
    %v204 = vmul.f32 %v162, 0.036000773
    %v210 = vrot.slane %v200, 2
    %v211 = vrot.slane %v201, 2
    %v212 = vrot.slane %v202, 2
    %v213 = vrot.slane %v203, 2
    %v214 = vrot.slane %v204, 2
    %v220 = vadd.f32 %v195, %v210
    %v221 = vadd.f32 %v196, %v211
    %v222 = vadd.f32 %v197, %v212
    %v223 = vadd.f32 %v198, %v213
    %v224 = vadd.f32 %v199, %v214
    %v225 = vmul.f32 %v122, 0.10936069
    %v226 = vmul.f32 %v127, 0.10936069
    %v227 = vmul.f32 %v132, 0.10936069
    %v228 = vmul.f32 %v137, 0.10936069
    %v229 = vmul.f32 %v142, 0.10936069
    %v230 = vmul.f32 %v147, 0.10936069
    %v231 = vmul.f32 %v152, 0.10936069
    %v232 = vmul.f32 %v157, 0.10936069
    %v233 = vmul.f32 %v162, 0.10936069
    %v234 = vmul.f32 %v167, 0.10936069
    %vm245 = vcmask 1044480
    %v246 = vrot.slane %v225, 3
    %v247 = vrot.slane %v226, 3
    %v248 = vsel %vm245, %v246, %v247
    %v249 = vrot.slane %v227, 3
    %v250 = vrot.slane %v228, 3
    %v251 = vsel %vm245, %v249, %v250
    %v252 = vrot.slane %v229, 3
    %v253 = vrot.slane %v230, 3
    %v254 = vsel %vm245, %v252, %v253
    %v255 = vrot.slane %v231, 3
    %v256 = vrot.slane %v232, 3
    %v257 = vsel %vm245, %v255, %v256
    %v258 = vrot.slane %v233, 3
    %v259 = vrot.slane %v234, 3
    %v260 = vsel %vm245, %v258, %v259
    %v266 = vadd.f32 %v220, %v248
    %v267 = vadd.f32 %v221, %v251
    %v268 = vadd.f32 %v222, %v254
    %v269 = vadd.f32 %v223, %v257
    %v270 = vadd.f32 %v224, %v260
    %v271 = vmul.f32 %v122, 0.21300554
    %v272 = vmul.f32 %v127, 0.21300554
    %v273 = vmul.f32 %v132, 0.21300554
    %v274 = vmul.f32 %v137, 0.21300554
    %v275 = vmul.f32 %v142, 0.21300554
    %v276 = vmul.f32 %v147, 0.21300554
    %v277 = vmul.f32 %v152, 0.21300554
    %v278 = vmul.f32 %v157, 0.21300554
    %v279 = vmul.f32 %v162, 0.21300554
    %v280 = vmul.f32 %v167, 0.21300554
    %vm291 = vcmask 1043456
    %v292 = vrot.slane %v271, 4
    %v293 = vrot.slane %v272, 4
    %v294 = vsel %vm291, %v292, %v293
    %v295 = vrot.slane %v273, 4
    %v296 = vrot.slane %v274, 4
    %v297 = vsel %vm291, %v295, %v296
    %v298 = vrot.slane %v275, 4
    %v299 = vrot.slane %v276, 4
    %v300 = vsel %vm291, %v298, %v299
    %v301 = vrot.slane %v277, 4
    %v302 = vrot.slane %v278, 4
    %v303 = vsel %vm291, %v301, %v302
    %v304 = vrot.slane %v279, 4
    %v305 = vrot.slane %v280, 4
    %v306 = vsel %vm291, %v304, %v305
    %v312 = vadd.f32 %v266, %v294
    %v313 = vadd.f32 %v267, %v297
    %v314 = vadd.f32 %v268, %v300
    %v315 = vadd.f32 %v269, %v303
    %v316 = vadd.f32 %v270, %v306
    %v317 = vmul.f32 %v122, 0.26601171
    %v318 = vmul.f32 %v127, 0.26601171
    %v319 = vmul.f32 %v132, 0.26601171
    %v320 = vmul.f32 %v137, 0.26601171
    %v321 = vmul.f32 %v142, 0.26601171
    %v322 = vmul.f32 %v147, 0.26601171
    %v323 = vmul.f32 %v152, 0.26601171
    %v324 = vmul.f32 %v157, 0.26601171
    %v325 = vmul.f32 %v162, 0.26601171
    %v326 = vmul.f32 %v167, 0.26601171
    %vm337 = vcmask 1042432
    %v338 = vrot.slane %v317, 5
    %v339 = vrot.slane %v318, 5
    %v340 = vsel %vm337, %v338, %v339
    %v341 = vrot.slane %v319, 5
    %v342 = vrot.slane %v320, 5
    %v343 = vsel %vm337, %v341, %v342
    %v344 = vrot.slane %v321, 5
    %v345 = vrot.slane %v322, 5
    %v346 = vsel %vm337, %v344, %v345
    %v347 = vrot.slane %v323, 5
    %v348 = vrot.slane %v324, 5
    %v349 = vsel %vm337, %v347, %v348
    %v350 = vrot.slane %v325, 5
    %v351 = vrot.slane %v326, 5
    %v352 = vsel %vm337, %v350, %v351
    %v358 = vadd.f32 %v312, %v340
    %v359 = vadd.f32 %v313, %v343
    %v360 = vadd.f32 %v314, %v346
    %v361 = vadd.f32 %v315, %v349
    %v362 = vadd.f32 %v316, %v352
    %vm363 = vcmask 1041408
    %v364 = vrot.slane %v271, 6
    %v365 = vrot.slane %v272, 6
    %v366 = vsel %vm363, %v364, %v365
    %v367 = vrot.slane %v273, 6
    %v368 = vrot.slane %v274, 6
    %v369 = vsel %vm363, %v367, %v368
    %v370 = vrot.slane %v275, 6
    %v371 = vrot.slane %v276, 6
    %v372 = vsel %vm363, %v370, %v371
    %v373 = vrot.slane %v277, 6
    %v374 = vrot.slane %v278, 6
    %v375 = vsel %vm363, %v373, %v374
    %v376 = vrot.slane %v279, 6
    %v377 = vrot.slane %v280, 6
    %v378 = vsel %vm363, %v376, %v377
    %v384 = vadd.f32 %v358, %v366
    %v385 = vadd.f32 %v359, %v369
    %v386 = vadd.f32 %v360, %v372
    %v387 = vadd.f32 %v361, %v375
    %v388 = vadd.f32 %v362, %v378
    %vm389 = vcmask 1040384
    %v390 = vrot.slane %v225, 7
    %v391 = vrot.slane %v226, 7
    %v392 = vsel %vm389, %v390, %v391
    %v393 = vrot.slane %v227, 7
    %v394 = vrot.slane %v228, 7
    %v395 = vsel %vm389, %v393, %v394
    %v396 = vrot.slane %v229, 7
    %v397 = vrot.slane %v230, 7
    %v398 = vsel %vm389, %v396, %v397
    %v399 = vrot.slane %v231, 7
    %v400 = vrot.slane %v232, 7
    %v401 = vsel %vm389, %v399, %v400
    %v402 = vrot.slane %v233, 7
    %v403 = vrot.slane %v234, 7
    %v404 = vsel %vm389, %v402, %v403
    %v410 = vadd.f32 %v384, %v392
    %v411 = vadd.f32 %v385, %v395
    %v412 = vadd.f32 %v386, %v398
    %v413 = vadd.f32 %v387, %v401
    %v414 = vadd.f32 %v388, %v404
    %v415 = vmul.f32 %v127, 0.036000773
    %v416 = vmul.f32 %v137, 0.036000773
    %v417 = vmul.f32 %v147, 0.036000773
    %v418 = vmul.f32 %v157, 0.036000773
    %v419 = vmul.f32 %v167, 0.036000773
    %v420 = vadd.f32 %v410, %v415
    %v421 = vadd.f32 %v411, %v416
    %v422 = vadd.f32 %v412, %v417
    %v423 = vadd.f32 %v413, %v418
    %v424 = vadd.f32 %v414, %v419
    %v425 = vmul.f32 %v127, 0.007598758
    %v426 = vmul.f32 %v137, 0.007598758
    %v427 = vmul.f32 %v147, 0.007598758
    %v428 = vmul.f32 %v157, 0.007598758
    %v429 = vmul.f32 %v167, 0.007598758
    %v435 = vrot.slane %v425, 1
    %v436 = vrot.slane %v426, 1
    %v437 = vrot.slane %v427, 1
    %v438 = vrot.slane %v428, 1
    %v439 = vrot.slane %v429, 1
    %v445 = vadd.f32 %v420, %v435
    %v446 = vadd.f32 %v421, %v436
    %v447 = vadd.f32 %v422, %v437
    %v448 = vadd.f32 %v423, %v438
    %v449 = vadd.f32 %v424, %v439
    %v450 = vmul.f32 %v127, 0.0010283801
    %v451 = vmul.f32 %v137, 0.0010283801
    %v452 = vmul.f32 %v147, 0.0010283801
    %v453 = vmul.f32 %v157, 0.0010283801
    %v454 = vmul.f32 %v167, 0.0010283801
    %v460 = vrot.slane %v450, 2
    %v461 = vrot.slane %v451, 2
    %v462 = vrot.slane %v452, 2
    %v463 = vrot.slane %v453, 2
    %v464 = vrot.slane %v454, 2
    %v470 = vadd.f32 %v445, %v460
    %v471 = vadd.f32 %v446, %v461
    %v472 = vadd.f32 %v447, %v462
    %v473 = vadd.f32 %v448, %v463
    %v474 = vadd.f32 %v449, %v464
    %v475 = vmul.f32 %v470, %v470
    %v476 = vsub.f32 %v472, %v475
    %v477 = vmul.f32 %v471, %v471
    %v478 = vsub.f32 %v473, %v477
    %v479 = vmul.f32 %v470, %v471
    %v480 = vsub.f32 %v474, %v479
    %v481 = vmul.f32 %v470, 2.0
    %v482 = vmul.f32 %v481, %v471
    %v483 = vadd.f32 %v482, 0.0001
    %v484 = vadd.f32 %v475, %v477
    %v485 = vadd.f32 %v484, 0.0001
    %v486 = vmul.f32 %v480, 2.0
    %v487 = vadd.f32 %v486, 0.0009
    %v488 = vadd.f32 %v476, %v478
    %v489 = vadd.f32 %v488, 0.0009
    %v490 = vrcp.pop %v485
    %v491 = vmul.f32 %v483, %v490
    %v492 = vmul.f32 %v491, %v487
    %v493 = vrcp.pop %v489
    %v494 = vmul.f32 %v492, %v493
    %vm495 = vcmask 390144
    %v496 = vsel %vm495, %v494, 0.0
    %497 = vadd.xlane.f32.xlu0 %v496
    %v498 = vpop.xlane.xlu0 %497
    %v499 = vrot.slane %v498, 4
    %v500 = vadd.f32 %v498, %v499
    %v501 = vrot.slane %v500, 2
    %v502 = vadd.f32 %v500, %v501
    %v503 = vrot.slane %v502, 1
    %v504 = vadd.f32 %v502, %v503
    %s505 = vtos %v504
    %v506 = vlaneseq
    %v507 = vshrl.u32 %v506, 7
    %vm508 = vcmp.eq.s32.totalorder %v507, 0
    %vm509 = vcmp.eq.s32.totalorder %v507, 1
    %v510 = vstv %s505
    %v511 = vsel %vm509, %v510, 0.0
    %v512 = vstv %s32
    %v513 = vsel %vm508, %v512, %v511
    %514 = vst [vmem:[#allocation2] sm:$0xff] %v513
    // Predicated region
    $region14: #{tpu_custom_call.1} parent=1 // pred_check
      _
    $region15: #{tpu_custom_call.1} parent=1 // pred_check_branch
      %516 = sbr.rel (0) target = $region17
    $region16: #{tpu_custom_call.1} parent=1 // pred_region
      %s518 = ssub.s32 128, 128
      %519 = vsyncadd [#allocation3], %s518
      %s521 = sshll.u32 [#allocation2], 4
      %s522 = int_to_ptr.vmem [resolvable:$true] %s521
      %524 = dma.vmem_to_hbm [thread:$0]  %s522, 128, %s3, [#allocation3]
    $region17: #{tpu_custom_call.1} parent=1 // pred_fallthru
      _
    // Predicated region
    $region18: #{tpu_custom_call.1} parent=1 // pred_check
      _
    $region19: #{tpu_custom_call.1} parent=1 // pred_check_branch
      %526 = sbr.rel (0) target = $region21
    $region20: #{tpu_custom_call.1} parent=1 // pred_region
      %527 = dma.done [#allocation3], 128
    $region21: #{tpu_custom_call.1} parent=1 // pred_fallthru
      _
    %528 = vsyncpa [#allocation3], 1

</llo_original>
